<compile_context>
chip_gen: v6e
topology: v6e:2x2x1
jax: 0.10.0
libtpu: 0.0.40
codegen_flags: <defaults>
</compile_context>

<pallas_src>
import functools

import jax
import jax.numpy as jnp
from jax.experimental import pallas as pl
from jax.experimental.pallas import tpu as pltpu


_VMEM_SOFT_BUDGET = 20 * 1024 * 1024     # conservative; fits v7x's 64 MiB VMEM
_VMEM_LIMIT = 48 * 1024 * 1024           # scoped VMEM limit (<= v7x physical)


def _dsconv_fused_kernel(x_ref, w_ref, b_ref, o_ref, *, tap_offsets, tile_len):
    """Fused depthwise+pointwise conv for one batch element (stride == 1).

      x_ref : (C_k, HP_ext * W_pad)  lane-flattened zero-padded image
      w_ref : (O, KH*KW*C_k)         folded depthwise (x) pointwise weights
      b_ref : (O, 1)                 folded bias (pw_b + pw @ dw_b)
      o_ref : (O, H_out * W_pad)     lane-flattened output (incl. halo columns)
    """
    x = x_ref[...].astype(jnp.float32)
    # In-kernel im2col: each tap is a static lane-offset slice of the flattened
    # slab (XLU shifts only, no reshape/relayout).  Row order is t*C_k + c,
    # matching W_eff.
    patches = jnp.concatenate(
        [x[:, off:off + tile_len] for off in tap_offsets], axis=0)
    y = jnp.dot(w_ref[...].astype(jnp.float32), patches,
                preferred_element_type=jnp.float32)
    y = y + b_ref[...].astype(jnp.float32)               # (O, 1) lane broadcast
    o_ref[...] = y.astype(o_ref.dtype)


def _pointwise_matmul_kernel(p_ref, w_ref, b_ref, o_ref):
    """out = W_eff @ im2col_patches + b_eff  (lane-dense tiled matmul)."""
    y = jnp.dot(w_ref[...].astype(jnp.float32), p_ref[...].astype(jnp.float32),
                preferred_element_type=jnp.float32)
    o_ref[...] = (y + b_ref[...].astype(jnp.float32)).astype(o_ref.dtype)


def _fold_weights(dw_w, dw_b, pw_w, pw_b, c_k):
    """Fold depthwise into pointwise: W_eff (O, KH*KW*C_k), b_eff (O, 1)."""
    C = dw_w.shape[0]
    KH, KW = dw_w.shape[2], dw_w.shape[3]
    O = pw_w.shape[0]
    dw_flat = dw_w[:, 0, :, :].reshape(C, KH * KW).astype(jnp.float32)
    dw_flat = jnp.pad(dw_flat, ((0, c_k - C), (0, 0)))            # (C_k, T)
    pw_mat = pw_w[:, :, 0, 0].astype(jnp.float32)
    pw_mat = jnp.pad(pw_mat, ((0, 0), (0, c_k - C)))              # (O, C_k)
    dw_bias = jnp.pad(dw_b.astype(jnp.float32), (0, c_k - C))     # (C_k,)
    # W_eff[o, t*C_k + c] = pw[o, c] * dw[c, t]  (pointwise conv is linear).
    w_eff = (pw_mat[:, None, :] * dw_flat.T[None, :, :]).reshape(O, KH * KW * c_k)
    b_eff = (pw_b.astype(jnp.float32) + pw_mat @ dw_bias).reshape(O, 1)
    return w_eff, b_eff


def dsconv2d(x_nchw, dw_w, dw_b, pw_w, pw_b, *, stride=1, padding=0, dilation=1):
    """Depthwise-separable conv, NCHW in / NCHW out (matches Dsconv2d.forward)."""
    N, C, H, W = x_nchw.shape
    KH, KW = dw_w.shape[2], dw_w.shape[3]
    O = pw_w.shape[0]
    T = KH * KW
    C_k = -(-C // 8) * 8                   # pad channels to a sublane multiple

    H_out = (H + 2 * padding - dilation * (KH - 1) - 1) // stride + 1
    W_out = (W + 2 * padding - dilation * (KW - 1) - 1) // stride + 1
    H_pad, W_pad = H + 2 * padding, W + 2 * padding

    w_eff, b_eff = _fold_weights(dw_w, dw_b, pw_w, pw_b, C_k)

    # -------------- fast path: stride == 1, one maximal tile per image ------
    halo = dilation * (KW - 1)             # extra (garbage) columns per row
    extra_rows = -(-halo // W_pad)         # tap slices overrun by <= halo lanes
    hp_ext = H_pad + extra_rows
    tile_len = H_out * W_pad
    fast_bytes = 4 * (3 * C_k * hp_ext * W_pad       # input block (+ load copy)
                      + 3 * T * C_k * tile_len       # im2col patch matrix
                      + 3 * O * tile_len             # output block / y
                      + O * T * C_k)                 # weights
    use_fast = (stride == 1) and (fast_bytes <= _VMEM_SOFT_BUDGET)

    if use_fast:
        x_pad = jnp.pad(
            x_nchw.astype(jnp.float32),
            ((0, 0), (0, C_k - C),
             (padding, padding + extra_rows), (padding, padding)))
        # Lane-flatten spatial in the wrapper (contiguous trailing dims: free).
        x_flat = x_pad.reshape(N, C_k, hp_ext * W_pad)
        tap_offsets = [kh * dilation * W_pad + kw * dilation
                       for kh in range(KH) for kw in range(KW)]

        kernel = functools.partial(_dsconv_fused_kernel,
                                   tap_offsets=tap_offsets, tile_len=tile_len)
        out_flat = pl.pallas_call(
            kernel,
            out_shape=jax.ShapeDtypeStruct((N, O, tile_len), x_nchw.dtype),
            grid=(N,),
            in_specs=[
                pl.BlockSpec((None, C_k, hp_ext * W_pad), lambda n: (n, 0, 0)),
                pl.BlockSpec((O, T * C_k), lambda n: (0, 0)),
                pl.BlockSpec((O, 1), lambda n: (0, 0)),
            ],
            out_specs=pl.BlockSpec((None, O, tile_len), lambda n: (n, 0, 0)),
            compiler_params=pltpu.CompilerParams(
                dimension_semantics=("parallel",),
                vmem_limit_bytes=_VMEM_LIMIT),
        )(x_flat, w_eff, b_eff)

        # Free trailing reshape + halo-column slice -> (N, O, H_out, W_out).
        return out_flat.reshape(N, O, H_out, W_pad)[:, :, :, :W_out]

    # ------ general path (stride > 1 or oversized): wrapper im2col + matmul --
    # TODO(synk): an in-kernel row-tiled im2col (manual DMA of row slabs) would
    # avoid the KH*KW-fold HBM expansion of the wrapper im2col for very large
    # strided images; unnecessary at these sizes.
    x_pad = jnp.pad(
        x_nchw.astype(jnp.float32),
        ((0, 0), (0, C_k - C), (padding, padding), (padding, padding)))
    taps = []
    for kh in range(KH):
        for kw in range(KW):
            h0, w0 = kh * dilation, kw * dilation
            taps.append(x_pad[:, :,
                              h0:h0 + (H_out - 1) * stride + 1:stride,
                              w0:w0 + (W_out - 1) * stride + 1:stride])
    M = H_out * W_out
    # (N, T, C_k, H_out, W_out) -> (N, T*C_k, M): row index = t*C_k + c.
    x_col = jnp.stack(taps, axis=1).reshape(N, T * C_k, M)

    def _tile_bytes(tm):
        return 4 * (3 * T * C_k * tm + 3 * O * tm + O * T * C_k)

    tm = M
    if _tile_bytes(M) > _VMEM_SOFT_BUDGET:
        cands = [t for t in range(128, M, 128)
                 if M % t == 0 and _tile_bytes(t) <= _VMEM_SOFT_BUDGET]
        if cands:
            tm = max(cands)          # largest 128-lane-multiple tile that fits

    out_flat = pl.pallas_call(
        _pointwise_matmul_kernel,
        out_shape=jax.ShapeDtypeStruct((N, O, M), x_nchw.dtype),
        grid=(N, M // tm),
        in_specs=[
            pl.BlockSpec((None, T * C_k, tm), lambda n, j: (n, 0, j)),
            pl.BlockSpec((O, T * C_k), lambda n, j: (0, 0)),
            pl.BlockSpec((O, 1), lambda n, j: (0, 0)),
        ],
        out_specs=pl.BlockSpec((None, O, tm), lambda n, j: (n, 0, j)),
        compiler_params=pltpu.CompilerParams(
            dimension_semantics=("parallel", "parallel"),
            vmem_limit_bytes=_VMEM_LIMIT),
    )(x_col, w_eff, b_eff)

    return out_flat.reshape(N, O, H_out, W_out)


def _reference(x_nchw, dw_w, dw_b, pw_w, pw_b, *, stride, padding, dilation):
    """Plain-JAX reference using lax.conv_general_dilated (NCHW)."""
    C = x_nchw.shape[1]
    y = jax.lax.conv_general_dilated(
        x_nchw, dw_w,
        window_strides=(stride, stride),
        padding=((padding, padding), (padding, padding)),
        rhs_dilation=(dilation, dilation),
        dimension_numbers=("NCHW", "OIHW", "NCHW"),
        feature_group_count=C)
    y = y + dw_b.reshape(1, -1, 1, 1)
    z = jax.lax.conv_general_dilated(
        y, pw_w,
        window_strides=(1, 1),
        padding=((0, 0), (0, 0)),
        dimension_numbers=("NCHW", "OIHW", "NCHW"))
    return z + pw_b.reshape(1, -1, 1, 1)


if __name__ == "__main__":
    # Module config: Dsconv2d(in_channels=4, out_channels=8, kernel_size=(3,3))
    N, C, H, W = 2, 4, 16, 16
    O = 8
    KH, KW = 3, 3

    key = jax.random.PRNGKey(0)
    kx, k1, k2, k3, k4 = jax.random.split(key, 5)
    x = jax.random.normal(kx, (N, C, H, W), jnp.float32)
    dw_w = 0.1 * jax.random.normal(k1, (C, 1, KH, KW), jnp.float32)   # depthwise
    dw_b = 0.1 * jax.random.normal(k2, (C,), jnp.float32)
    pw_w = 0.1 * jax.random.normal(k3, (O, C, 1, 1), jnp.float32)     # pointwise
    pw_b = 0.1 * jax.random.normal(k4, (O,), jnp.float32)

    # (stride, padding, dilation): main config (fast path), dilated fast path,
    # and a strided case exercising the general fallback path.
    for stride, padding, dilation in ((1, 1, 1), (1, 2, 2), (2, 1, 1)):
        out = dsconv2d(x, dw_w, dw_b, pw_w, pw_b,
                       stride=stride, padding=padding, dilation=dilation)
        out = jax.block_until_ready(out)
        ref = _reference(x, dw_w, dw_b, pw_w, pw_b,
                         stride=stride, padding=padding, dilation=dilation)
        assert out.shape == ref.shape, (out.shape, ref.shape)
        err = float(jnp.max(jnp.abs(out - ref)))
        assert jnp.allclose(out, ref, atol=1e-4, rtol=1e-4), \
            ((stride, padding, dilation), err)

    print("KERNEL_OK")
</pallas_src>

<mosaic_0001>
module attributes {stable_mosaic.version = 11 : i64} {
  func.func @_dsconv_fused_kernel(%arg0: i32, %arg1: memref<1x8x342xf32, #tpu.memory_space<vmem>>, %arg2: memref<8x72xf32, #tpu.memory_space<vmem>>, %arg3: memref<8x1xf32, #tpu.memory_space<vmem>>, %arg4: memref<1x8x288xf32, #tpu.memory_space<vmem>>) attributes {dimension_semantics = [#tpu.dimension_semantics<parallel>], iteration_bounds = array<i64: 2>, scalar_prefetch = 0 : i64, scratch_operands = 0 : i64, tpu.core_type = #tpu.core_type<tc>, window_params = [{transform_indices = @transform_0, window_bounds = array<i64: 1, 8, 342>}, {pipeline_mode = #tpu.pipeline_mode<synchronous>, transform_indices = @transform_1, window_bounds = array<i64: 8, 72>}, {pipeline_mode = #tpu.pipeline_mode<synchronous>, transform_indices = @transform_2, window_bounds = array<i64: 8, 1>}, {transform_indices = @transform_3, window_bounds = array<i64: 1, 8, 288>}]} {
    %c0 = arith.constant 0 : index
    %c0_0 = arith.constant 0 : index
    %c0_1 = arith.constant 0 : index
    %0 = vector.load %arg1[%c0, %c0_0, %c0_1] : memref<1x8x342xf32, #tpu.memory_space<vmem>>, vector<1x8x342xf32>
    %1 = vector.shape_cast %0 : vector<1x8x342xf32> to vector<8x342xf32>
    %2 = vector.extract_strided_slice %1 {offsets = [0, 0], sizes = [8, 288], strides = [1, 1]} : vector<8x342xf32> to vector<8x288xf32>
    %3 = vector.extract_strided_slice %1 {offsets = [0, 1], sizes = [8, 288], strides = [1, 1]} : vector<8x342xf32> to vector<8x288xf32>
    %4 = vector.extract_strided_slice %1 {offsets = [0, 2], sizes = [8, 288], strides = [1, 1]} : vector<8x342xf32> to vector<8x288xf32>
    %5 = vector.extract_strided_slice %1 {offsets = [0, 18], sizes = [8, 288], strides = [1, 1]} : vector<8x342xf32> to vector<8x288xf32>
    %6 = vector.extract_strided_slice %1 {offsets = [0, 19], sizes = [8, 288], strides = [1, 1]} : vector<8x342xf32> to vector<8x288xf32>
    %7 = vector.extract_strided_slice %1 {offsets = [0, 20], sizes = [8, 288], strides = [1, 1]} : vector<8x342xf32> to vector<8x288xf32>
    %8 = vector.extract_strided_slice %1 {offsets = [0, 36], sizes = [8, 288], strides = [1, 1]} : vector<8x342xf32> to vector<8x288xf32>
    %9 = vector.extract_strided_slice %1 {offsets = [0, 37], sizes = [8, 288], strides = [1, 1]} : vector<8x342xf32> to vector<8x288xf32>
    %10 = vector.extract_strided_slice %1 {offsets = [0, 38], sizes = [8, 288], strides = [1, 1]} : vector<8x342xf32> to vector<8x288xf32>
    %11 = tpu.concatenate %2, %3, %4, %5, %6, %7, %8, %9, %10 in 0 : vector<8x288xf32>, vector<8x288xf32>, vector<8x288xf32>, vector<8x288xf32>, vector<8x288xf32>, vector<8x288xf32>, vector<8x288xf32>, vector<8x288xf32>, vector<8x288xf32> -> vector<72x288xf32>
    %c0_2 = arith.constant 0 : index
    %c0_3 = arith.constant 0 : index
    %12 = vector.load %arg2[%c0_2, %c0_3] : memref<8x72xf32, #tpu.memory_space<vmem>>, vector<8x72xf32>
    %cst = arith.constant dense<0.000000e+00> : vector<8x288xf32>
    %13 = tpu.matmul %12, %11, %cst {dimension_numbers = #tpu.dot_dimension_numbers<[1], [0], [0], [1], [0, 0, 1, 1], [], []>} : vector<8x72xf32>, vector<72x288xf32>, vector<8x288xf32> -> vector<8x288xf32>
    %c0_4 = arith.constant 0 : index
    %c0_5 = arith.constant 0 : index
    %14 = vector.load %arg3[%c0_4, %c0_5] : memref<8x1xf32, #tpu.memory_space<vmem>>, vector<8x1xf32>
    %15 = vector.broadcast %14 : vector<8x1xf32> to vector<8x288xf32>
    %16 = arith.addf %13, %15 : vector<8x288xf32>
    %c0_6 = arith.constant 0 : index
    %c0_7 = arith.constant 0 : index
    %c0_8 = arith.constant 0 : index
    %17 = vector.load %arg4[%c0_6, %c0_7, %c0_8] : memref<1x8x288xf32, #tpu.memory_space<vmem>>, vector<1x8x288xf32>
    %18 = vector.shape_cast %17 : vector<1x8x288xf32> to vector<8x288xf32>
    %19 = vector.shape_cast %16 : vector<8x288xf32> to vector<1x8x288xf32>
    tpu.vector_store %arg4[%c0_6, %c0_7, %c0_8], %19 {strides = array<i32>} : memref<1x8x288xf32, #tpu.memory_space<vmem>>, vector<1x8x288xf32>,
    return
  }
  func.func @transform_0(%arg0: i32) -> (i32, i32, i32) {
    %c0_i32 = arith.constant 0 : i32
    %c0_i32_0 = arith.constant 0 : i32
    %c0_i32_1 = arith.constant 0 : i32
    return %arg0, %c0_i32, %c0_i32_0 : i32, i32, i32
  }
  func.func @transform_1(%arg0: i32) -> (i32, i32) {
    %c0_i32 = arith.constant 0 : i32
    %c0_i32_0 = arith.constant 0 : i32
    %c0_i32_1 = arith.constant 0 : i32
    return %c0_i32, %c0_i32_0 : i32, i32
  }
  func.func @transform_2(%arg0: i32) -> (i32, i32) {
    %c0_i32 = arith.constant 0 : i32
    %c0_i32_0 = arith.constant 0 : i32
    %c0_i32_1 = arith.constant 0 : i32
    return %c0_i32, %c0_i32_0 : i32, i32
  }
  func.func @transform_3(%arg0: i32) -> (i32, i32, i32) {
    %c0_i32 = arith.constant 0 : i32
    %c0_i32_0 = arith.constant 0 : i32
    %c0_i32_1 = arith.constant 0 : i32
    return %arg0, %c0_i32, %c0_i32_0 : i32, i32, i32
  }
}

</mosaic_0001>

<llo_original>
// kernel: tpu_custom_call.1
$region0: #{tpu_custom_call.1}
  #allocation0 [shape = 'u32[]', space=smem, size = 0x4, offset = 0x4, fixed_abs, tag = 'smem constant byte address 0x4 - core index']
  #allocation1 [shape = 'u32[144,128]{1,0:T(1,128)}', space=vmem, size = 0x12000, scoped, tag = 'internal scratch']
  %s0 = inlined_call_operand.hbm [shape: f32[2,8,342], index: 0, kind: input, shape index: {}]
  %s1 = inlined_call_operand.vmem [shape: f32[8,72], index: 1, kind: input, shape index: {}]
  %s2 = inlined_call_operand.vmem [shape: f32[8,1], index: 2, kind: input, shape index: {}]
  %s3 = inlined_call_operand.hbm [shape: f32[2,8,288], index: 3, kind: output, shape index: {}]
  %s4 = sld [smem:[#allocation0]]
  $region49: #{tpu_custom_call.1} parent=0
    _
  %s6 = ssub.s32 1, %s4
  %s7 = scalar_select 0, %s6, %s4
  $region1: #{tpu_custom_call.1} parent=0
    #allocation2 [shape = 'u8[24576]{0}', space=vmem, size = 0x6000, scoped, tag = 'input window, operand 0']
    #allocation3 [shape = 's32[2]{0}', space=sflag, size = 0x8, scoped, tag = 'scoped memory for tpu_custom_call.1']
    #allocation4 [shape = 's32[2]{0}', space=sflag, size = 0x8, scoped, tag = 'scoped memory for tpu_custom_call.1']
    #allocation5 [shape = 'u8[24576]{0}', space=vmem, size = 0x6000, scoped, tag = 'output window, operand 0']
    %8 = vsyncpa [#allocation3], 0
    %s9 = scalar_lea.sflag [#allocation3], 1
    %10 = vsyncpa %s9, 0
    %11 = vsyncpa [#allocation4], 0
    %s12 = scalar_lea.sflag [#allocation4], 1
    %13 = vsyncpa %s12, 0
    loop: start=0, step=1, limit=4
    $region2: #{tpu_custom_call.1} parent=1 // loop_pre_header
      _
    $region3: #{tpu_custom_call.1} parent=1 // loop_header
      %s15 = sphi 0, %s19
      %p16 = scmp.ge.s32.totalorder %s15, 4
      %s25 = sphi 0, %s27
      %s28 = sphi 0, %s25
      %s29 = sphi 0, %s28
      %s45 = sphi 0, %s29
      %s49 = sphi 0, %s49
      %s51 = sphi 0, %s49
      %s52 = sphi 0, %s51
      %s66 = sphi 0, %s52
      %s70 = sphi 0, %s70
      %s72 = sphi 0, %s70
      %s73 = sphi 0, %s72
      %s87 = sphi 0, %s73
      %s93 = sphi 0, %s95
      %s96 = sphi 0, %s93
      %s97 = sphi 0, %s96
      %s113 = sphi 0, %s97
    $region4: #{tpu_custom_call.1} parent=1 // loop_header_branch
      %18 = sbr.rel (%p16) target = $region8
    $region5: #{tpu_custom_call.1} parent=1 // loop_body
      %s20 = ssub.s32 %s15, 1
      %s21 = ssub.s32 %s15, 2
      %s22 = sadd.s32 %s15, 1
      %s23 = ssub.s32 %s15, %s22
      %p24 = scmp.eq.s32.totalorder %s23, 0
      %s26 = sadd.s32 %s25, 1
      %s27 = scalar_select %p24, %s25, %s26
      %p30 = pneg %p24
      %p31 = scmp.eq.s32.totalorder %s15, 1
      %p32 = por %p30, %p31
      %p33 = scmp.ne.s32.totalorder %s25, %s28
      %p34 = scmp.eq.s32.totalorder %s15, 0
      %p35 = por %p33, %p34
      %p36 = scmp.ne.s32.totalorder %s25, %s28
      %p37 = scmp.eq.s32.totalorder %s20, 1
      %p38 = por %p36, %p37
      %p39 = scmp.ne.s32.totalorder %s28, %s29
      %p40 = scmp.eq.s32.totalorder %s20, 0
      %p41 = por %p39, %p40
      %p42 = scmp.ne.s32.totalorder %s28, %s29
      %p43 = scmp.eq.s32.totalorder %s21, 1
      %p44 = por %p42, %p43
      %p46 = scmp.ne.s32.totalorder %s29, %s45
      %p47 = scmp.eq.s32.totalorder %s21, 0
      %p48 = por %p46, %p47
      %s50 = sadd.s32 %s49, 1
      %p53 = scmp.eq.s32.totalorder %s15, 1
      %p54 = scmp.ne.s32.totalorder %s49, %s51
      %p55 = scmp.eq.s32.totalorder %s15, 0
      %p56 = por %p54, %p55
      %p57 = scmp.ne.s32.totalorder %s49, %s51
      %p58 = scmp.eq.s32.totalorder %s20, 1
      %p59 = por %p57, %p58
      %p60 = scmp.ne.s32.totalorder %s51, %s52
      %p61 = scmp.eq.s32.totalorder %s20, 0
      %p62 = por %p60, %p61
      %p63 = scmp.ne.s32.totalorder %s51, %s52
      %p64 = scmp.eq.s32.totalorder %s21, 1
      %p65 = por %p63, %p64
      %p67 = scmp.ne.s32.totalorder %s52, %s66
      %p68 = scmp.eq.s32.totalorder %s21, 0
      %p69 = por %p67, %p68
      %s71 = sadd.s32 %s70, 1
      %p74 = scmp.eq.s32.totalorder %s15, 1
      %p75 = scmp.ne.s32.totalorder %s70, %s72
      %p76 = scmp.eq.s32.totalorder %s15, 0
      %p77 = por %p75, %p76
      %p78 = scmp.ne.s32.totalorder %s70, %s72
      %p79 = scmp.eq.s32.totalorder %s20, 1
      %p80 = por %p78, %p79
      %p81 = scmp.ne.s32.totalorder %s72, %s73
      %p82 = scmp.eq.s32.totalorder %s20, 0
      %p83 = por %p81, %p82
      %p84 = scmp.ne.s32.totalorder %s72, %s73
      %p85 = scmp.eq.s32.totalorder %s21, 1
      %p86 = por %p84, %p85
      %p88 = scmp.ne.s32.totalorder %s73, %s87
      %p89 = scmp.eq.s32.totalorder %s21, 0
      %p90 = por %p88, %p89
      %s91 = ssub.s32 %s15, %s22
      %p92 = scmp.eq.s32.totalorder %s91, 0
      %s94 = sadd.s32 %s93, 1
      %s95 = scalar_select %p92, %s93, %s94
      %p98 = pneg %p92
      %p99 = scmp.eq.s32.totalorder %s15, 1
      %p100 = por %p98, %p99
      %p101 = scmp.ne.s32.totalorder %s93, %s96
      %p102 = scmp.eq.s32.totalorder %s15, 0
      %p103 = por %p101, %p102
      %p104 = scmp.ne.s32.totalorder %s93, %s96
      %p105 = scmp.eq.s32.totalorder %s20, 1
      %p106 = por %p104, %p105
      %p107 = scmp.ne.s32.totalorder %s96, %s97
      %p108 = scmp.eq.s32.totalorder %s20, 0
      %p109 = por %p107, %p108
      %p110 = scmp.ne.s32.totalorder %s96, %s97
      %p111 = scmp.eq.s32.totalorder %s21, 1
      %p112 = por %p110, %p111
      %p114 = scmp.ne.s32.totalorder %s97, %s113
      %p115 = scmp.eq.s32.totalorder %s21, 0
      %p116 = por %p114, %p115
      %p117 = scmp.le.s32.totalorder 1, %s15
      %p118 = scmp.lt.s32.totalorder %s15, 3
      %p119 = pnand %p117, %p118
      %p120 = pneg %p119
      // Predicated region
      $region9: #{tpu_custom_call.1} parent=5 // pred_check
        _
      $region10: #{tpu_custom_call.1} parent=5 // pred_check_branch
        %122 = sbr.rel (%p119) target = $region12
      $region11: #{tpu_custom_call.1} parent=5 // pred_region
        %s123 = ssub.s32 %s15, 1
        // Predicated region
        $region13: #{tpu_custom_call.1} parent=11 // pred_check
          %p124 = pneg %p62
        $region14: #{tpu_custom_call.1} parent=11 // pred_check_branch
          %126 = sbr.rel (%p124) target = $region16
        $region15: #{tpu_custom_call.1} parent=11 // pred_region
          _
        $region16: #{tpu_custom_call.1} parent=11 // pred_fallthru
          _
        // Predicated region
        $region17: #{tpu_custom_call.1} parent=11 // pred_check
          %p127 = pneg %p83
        $region18: #{tpu_custom_call.1} parent=11 // pred_check_branch
          %129 = sbr.rel (%p127) target = $region20
        $region19: #{tpu_custom_call.1} parent=11 // pred_region
          _
        $region20: #{tpu_custom_call.1} parent=11 // pred_fallthru
          _
      $region12: #{tpu_custom_call.1} parent=5 // pred_fallthru
        _
      %p130 = scmp.lt.s32.totalorder %s15, 2
      // Predicated region
      $region21: #{tpu_custom_call.1} parent=5 // pred_check
        %p131 = pneg %p130
      $region22: #{tpu_custom_call.1} parent=5 // pred_check_branch
        %133 = sbr.rel (%p131) target = $region24
      $region23: #{tpu_custom_call.1} parent=5 // pred_region
        // Predicated region
        $region25: #{tpu_custom_call.1} parent=23 // pred_check
          %p134 = pneg %p35
        $region26: #{tpu_custom_call.1} parent=23 // pred_check_branch
          %136 = sbr.rel (%p134) target = $region28
        $region27: #{tpu_custom_call.1} parent=23 // pred_region
          %s137 = sand.u32 %s25, 1
          %s138 = scalar_lea.sflag [#allocation3], %s137
          %s139 = sand.u32 %s25, 1
          %s140 = smul.addr %s139, 24
          %s141 = scalar_lea.vmem [#allocation2], %s140
          %s143 = ssub.s32 384, 384
          %144 = vsyncadd %s138, %s143
          %s145 = smul.addr %s15, 3
          %s146 = smul.addr %s145, 128
          %s147 = scalar_lea.hbm %s0, %s146
          %s149 = sshll.u32 %s141, 4
          %s150 = int_to_ptr.vmem [resolvable:$true] %s149
          %152 = dma.hbm_to_vmem [thread:$0]  %s147, 384, %s150, %s138
        $region28: #{tpu_custom_call.1} parent=23 // pred_fallthru
          _
      $region24: #{tpu_custom_call.1} parent=5 // pred_fallthru
        _
      %p153 = scmp.le.s32.totalorder 1, %s15
      %p154 = scmp.lt.s32.totalorder %s15, 3
      %p155 = pnand %p153, %p154
      %p156 = pneg %p155
      // Predicated region
      $region29: #{tpu_custom_call.1} parent=5 // pred_check
        _
      $region30: #{tpu_custom_call.1} parent=5 // pred_check_branch
        %158 = sbr.rel (%p155) target = $region32
      $region31: #{tpu_custom_call.1} parent=5 // pred_region
        %s159 = ssub.s32 %s15, 1
        %s160 = sand.u32 %s28, 1
        %s161 = scalar_lea.sflag [#allocation3], %s160
        %s162 = sand.u32 %s28, 1
        %s163 = smul.addr %s162, 24
        %s164 = scalar_lea.vmem [#allocation2], %s163
        // Predicated region
        $region33: #{tpu_custom_call.1} parent=31 // pred_check
          %p165 = pneg %p41
        $region34: #{tpu_custom_call.1} parent=31 // pred_check_branch
          %167 = sbr.rel (%p165) target = $region36
        $region35: #{tpu_custom_call.1} parent=31 // pred_region
          %168 = dma.done %s161, 384
        $region36: #{tpu_custom_call.1} parent=31 // pred_fallthru
          _
        %s169 = sand.u32 %s28, 1
        %s170 = scalar_lea.sflag [#allocation3], %s169
        %s171 = sand.u32 %s28, 1
        %s172 = smul.addr %s171, 24
        %s173 = scalar_lea.vmem [#allocation2], %s172
        %p174 = pneg %p41
        %p175 = pneg %p38
        %p176 = pneg %p62
        %p177 = pneg %p59
        %p178 = pneg %p83
        %p179 = pneg %p80
        %p180 = pneg %p109
        %p181 = pneg %p106
        %s182 = sand.u32 %s96, 1
        %s183 = scalar_lea.sflag [#allocation4], %s182
        %s184 = sand.u32 %s96, 1
        %s185 = smul.addr %s184, 24
        %s186 = scalar_lea.vmem [#allocation5], %s185
        %v187 = vld [vmem:[%s164] sm:$0xff]
        %v188 = vld [vmem:[%s164 + $0x8] sm:$0xff]
        %v189 = vld [vmem:[%s164 + $0x10] sm:$0xff]
        %193 = vrot.lane.b32.xlu0 %v187, 127
        %v194 = vpop.permute.xlu0 %193
        %195 = vrot.lane.b32.xlu0 %v188, 127
        %v196 = vpop.permute.xlu0 %195
        %197 = vrot.lane.b32.xlu0 %v189, 127
        %v198 = vpop.permute.xlu0 %197
        %vm199 = vcmask 1039360
        %v200 = vsel %vm199, %v194, %v196
        %v201 = vsel %vm199, %v196, %v198
        %205 = vrot.lane.b32.xlu0 %v187, 126
        %v206 = vpop.permute.xlu0 %205
        %207 = vrot.lane.b32.xlu0 %v188, 126
        %v208 = vpop.permute.xlu0 %207
        %209 = vrot.lane.b32.xlu0 %v189, 126
        %v210 = vpop.permute.xlu0 %209
        %vm211 = vcmask 1031168
        %v212 = vsel %vm211, %v206, %v208
        %v213 = vsel %vm211, %v208, %v210
        %217 = vrot.lane.b32.xlu0 %v187, 110
        %v218 = vpop.permute.xlu0 %217
        %219 = vrot.lane.b32.xlu0 %v188, 110
        %v220 = vpop.permute.xlu0 %219
        %221 = vrot.lane.b32.xlu0 %v189, 110
        %v222 = vpop.permute.xlu0 %221
        %vm223 = vcmask 900096
        %v224 = vsel %vm223, %v218, %v220
        %v225 = vsel %vm223, %v220, %v222
        %229 = vrot.lane.b32.xlu0 %v187, 109
        %v230 = vpop.permute.xlu0 %229
        %231 = vrot.lane.b32.xlu0 %v188, 109
        %v232 = vpop.permute.xlu0 %231
        %233 = vrot.lane.b32.xlu0 %v189, 109
        %v234 = vpop.permute.xlu0 %233
        %vm235 = vcmask 891904
        %v236 = vsel %vm235, %v230, %v232
        %v237 = vsel %vm235, %v232, %v234
        %241 = vrot.lane.b32.xlu0 %v187, 108
        %v242 = vpop.permute.xlu0 %241
        %243 = vrot.lane.b32.xlu0 %v188, 108
        %v244 = vpop.permute.xlu0 %243
        %245 = vrot.lane.b32.xlu0 %v189, 108
        %v246 = vpop.permute.xlu0 %245
        %vm247 = vcmask 883712
        %v248 = vsel %vm247, %v242, %v244
        %v249 = vsel %vm247, %v244, %v246
        %253 = vrot.lane.b32.xlu0 %v187, 92
        %v254 = vpop.permute.xlu0 %253
        %255 = vrot.lane.b32.xlu0 %v188, 92
        %v256 = vpop.permute.xlu0 %255
        %257 = vrot.lane.b32.xlu0 %v189, 92
        %v258 = vpop.permute.xlu0 %257
        %vm259 = vcmask 752640
        %v260 = vsel %vm259, %v254, %v256
        %v261 = vsel %vm259, %v256, %v258
        %265 = vrot.lane.b32.xlu0 %v187, 91
        %v266 = vpop.permute.xlu0 %265
        %267 = vrot.lane.b32.xlu0 %v188, 91
        %v268 = vpop.permute.xlu0 %267
        %269 = vrot.lane.b32.xlu0 %v189, 91
        %v270 = vpop.permute.xlu0 %269
        %vm271 = vcmask 744448
        %v272 = vsel %vm271, %v266, %v268
        %v273 = vsel %vm271, %v268, %v270
        %277 = vrot.lane.b32.xlu0 %v187, 90
        %v278 = vpop.permute.xlu0 %277
        %279 = vrot.lane.b32.xlu0 %v188, 90
        %v280 = vpop.permute.xlu0 %279
        %281 = vrot.lane.b32.xlu0 %v189, 90
        %v282 = vpop.permute.xlu0 %281
        %vm283 = vcmask 736256
        %v284 = vsel %vm283, %v278, %v280
        %v285 = vsel %vm283, %v280, %v282
        %v289 = vld [vmem:[%s1] sm:$0xff]
        %v290 = vld [vmem:[%s2] sm:$0xff]
        %292 = vset.pattern.permute.xlu0 0
        %293 = vperm.xlu0 %292, %v290
        %v294 = vpop.permute.xlu0 %293
        %vm296 = vcmask 588800
        %v298 = vsel %vm296, %v289, 0
        %300 = vmatprep.subr.mxu0 0.0
        %301 = vmatpush1.msra.mxu0 0.0
        %302 = vmatprep.subr.mxu0 0.0
        %303 = vmatpush1.msra.mxu0 0.0
        %304 = vmatprep.subr.mxu0 0.0
        %305 = vmatpush1.msra.mxu0 0.0
        %306 = vmatprep.subr.mxu0 0.0
        %307 = vmatpush1.msra.mxu0 0.0
        %308 = vmatprep.subr.mxu0 0.0
        %309 = vmatpush1.msra.mxu0 0.0
        %310 = vmatprep.subr.mxu0 0.0
        %311 = vmatpush1.msra.mxu0 0.0
        %312 = vmatprep.subr.mxu0 0.0
        %313 = vmatpush1.msra.mxu0 0.0
        %314 = vmatprep.subr.mxu0 %v285
        %315 = vmatpush1.msra.mxu0 %v284
        %316 = vmatprep.subr.mxu0 %v273
        %317 = vmatpush1.msra.mxu0 %v272
        %318 = vmatprep.subr.mxu0 %v261
        %319 = vmatpush1.msra.mxu0 %v260
        %320 = vmatprep.subr.mxu0 %v249
        %321 = vmatpush1.msra.mxu0 %v248
        %322 = vmatprep.subr.mxu0 %v237
        %323 = vmatpush1.msra.mxu0 %v236
        %324 = vmatprep.subr.mxu0 %v225
        %325 = vmatpush1.msra.mxu0 %v224
        %326 = vmatprep.subr.mxu0 %v213
        %327 = vmatpush1.msra.mxu0 %v212
        %328 = vmatprep.subr.mxu0 %v201
        %329 = vmatpush1.msra.mxu0 %v200
        %330 = vmatprep.subr.mxu0 %v188
        %331 = vmatpush1.msra.mxu0 %v187
        %332 = vmatprep.subr.mxu0 0.0
        %333 = vmatpush2.msra.mxu0 0.0
        %334 = vmatprep.subr.mxu0 0.0
        %335 = vmatpush2.msra.mxu0 0.0
        %336 = vmatprep.subr.mxu0 0.0
        %337 = vmatpush2.msra.mxu0 0.0
        %338 = vmatprep.subr.mxu0 0.0
        %339 = vmatpush2.msra.mxu0 0.0
        %340 = vmatprep.subr.mxu0 0.0
        %341 = vmatpush2.msra.mxu0 0.0
        %342 = vmatprep.subr.mxu0 0.0
        %343 = vmatpush2.msra.mxu0 0.0
        %344 = vmatprep.subr.mxu0 0.0
        %345 = vmatpush2.msra.mxu0 0.0
        %346 = vmatprep.subr.mxu0 0.0
        %347 = vmatpush2.msra.mxu0 0.0
        %348 = vmatprep.subr.mxu0 0.0
        %349 = vmatpush2.msra.mxu0 0.0
        %350 = vmatprep.subr.mxu0 0.0
        %351 = vmatpush2.msra.mxu0 0.0
        %352 = vmatprep.subr.mxu0 0.0
        %353 = vmatpush2.msra.mxu0 0.0
        %354 = vmatprep.subr.mxu0 0.0
        %355 = vmatpush2.msra.mxu0 0.0
        %356 = vmatprep.subr.mxu0 0.0
        %357 = vmatpush2.msra.mxu0 0.0
        %358 = vmatprep.subr.mxu0 0.0
        %359 = vmatpush2.msra.mxu0 0.0
        %360 = vmatprep.subr.mxu0 0.0
        %361 = vmatpush2.msra.mxu0 0.0
        %362 = vmatprep.subr.mxu0 0.0
        %363 = vmatpush2.msra.mxu0 0.0
        %364 = vmatprep.mubr.f32.mxu0 0.0
        %365 = vmatmul.mubr.f32.gmra.mxu0 %v298
        %v366 = vpop.f32.mrf.mxu0
        %v367 = vadd.f32 %v294, %v366
        %v368 = vpop.f32.mrf.mxu0
        %v369 = vadd.f32 %v294, %v368
        %370 = vdwg.mxu0
        %371 = vmatprep.subr.mxu0 0.0
        %372 = vmatpush1.msra.mxu0 0.0
        %373 = vmatprep.subr.mxu0 0.0
        %374 = vmatpush1.msra.mxu0 0.0
        %375 = vmatprep.subr.mxu0 0.0
        %376 = vmatpush1.msra.mxu0 0.0
        %377 = vmatprep.subr.mxu0 0.0
        %378 = vmatpush1.msra.mxu0 0.0
        %379 = vmatprep.subr.mxu0 0.0
        %380 = vmatpush1.msra.mxu0 0.0
        %381 = vmatprep.subr.mxu0 0.0
        %382 = vmatpush1.msra.mxu0 0.0
        %383 = vmatprep.subr.mxu0 0.0
        %384 = vmatpush1.msra.mxu0 0.0
        %385 = vmatprep.subr.mxu0 0.0
        %386 = vmatpush1.msra.mxu0 %v282
        %387 = vmatprep.subr.mxu0 0.0
        %388 = vmatpush1.msra.mxu0 %v270
        %389 = vmatprep.subr.mxu0 0.0
        %390 = vmatpush1.msra.mxu0 %v258
        %391 = vmatprep.subr.mxu0 0.0
        %392 = vmatpush1.msra.mxu0 %v246
        %393 = vmatprep.subr.mxu0 0.0
        %394 = vmatpush1.msra.mxu0 %v234
        %395 = vmatprep.subr.mxu0 0.0
        %396 = vmatpush1.msra.mxu0 %v222
        %397 = vmatprep.subr.mxu0 0.0
        %398 = vmatpush1.msra.mxu0 %v210
        %399 = vmatprep.subr.mxu0 0.0
        %400 = vmatpush1.msra.mxu0 %v198
        %401 = vmatprep.subr.mxu0 0.0
        %402 = vmatpush1.msra.mxu0 %v189
        %403 = vmatprep.subr.mxu0 0.0
        %404 = vmatpush2.msra.mxu0 0.0
        %405 = vmatprep.subr.mxu0 0.0
        %406 = vmatpush2.msra.mxu0 0.0
        %407 = vmatprep.subr.mxu0 0.0
        %408 = vmatpush2.msra.mxu0 0.0
        %409 = vmatprep.subr.mxu0 0.0
        %410 = vmatpush2.msra.mxu0 0.0
        %411 = vmatprep.subr.mxu0 0.0
        %412 = vmatpush2.msra.mxu0 0.0
        %413 = vmatprep.subr.mxu0 0.0
        %414 = vmatpush2.msra.mxu0 0.0
        %415 = vmatprep.subr.mxu0 0.0
        %416 = vmatpush2.msra.mxu0 0.0
        %417 = vmatprep.subr.mxu0 0.0
        %418 = vmatpush2.msra.mxu0 0.0
        %419 = vmatprep.subr.mxu0 0.0
        %420 = vmatpush2.msra.mxu0 0.0
        %421 = vmatprep.subr.mxu0 0.0
        %422 = vmatpush2.msra.mxu0 0.0
        %423 = vmatprep.subr.mxu0 0.0
        %424 = vmatpush2.msra.mxu0 0.0
        %425 = vmatprep.subr.mxu0 0.0
        %426 = vmatpush2.msra.mxu0 0.0
        %427 = vmatprep.subr.mxu0 0.0
        %428 = vmatpush2.msra.mxu0 0.0
        %429 = vmatprep.subr.mxu0 0.0
        %430 = vmatpush2.msra.mxu0 0.0
        %431 = vmatprep.subr.mxu0 0.0
        %432 = vmatpush2.msra.mxu0 0.0
        %433 = vmatprep.subr.mxu0 0.0
        %434 = vmatpush2.msra.mxu0 0.0
        %435 = vmatprep.mubr.f32.mxu0 0.0
        %436 = vmatmul.mubr.f32.gmra.mxu0 %v298
        %v437 = vpop.f32.mrf.mxu0
        %v438 = vadd.f32 %v294, %v437
        %v439 = vpop.f32.mrf.mxu0
        %440 = vdwg.mxu0
        %441 = vst [vmem:[%s186] sm:$0xff] %v367
        %442 = vst [vmem:[%s186 + $0x8] sm:$0xff] %v369
        %vm443 = vcmask 261120
        %444 = vst.msk [vmem:[%s186 + $0x10] sm:$0xff] %vm443, %v438
        %s445 = sand.u32 %s96, 1
        %s446 = scalar_lea.sflag [#allocation4], %s445
        %s447 = sand.u32 %s96, 1
        %s448 = smul.addr %s447, 24
        %s449 = scalar_lea.vmem [#allocation5], %s448
        // Predicated region
        $region37: #{tpu_custom_call.1} parent=31 // pred_check
          %p450 = pneg %p106
        $region38: #{tpu_custom_call.1} parent=31 // pred_check_branch
          %452 = sbr.rel (%p450) target = $region40
        $region39: #{tpu_custom_call.1} parent=31 // pred_region
          %s454 = ssub.s32 384, 384
          %455 = vsyncadd %s446, %s454
          %s456 = smul.addr %s20, 3
          %s457 = smul.addr %s456, 128
          %s458 = scalar_lea.hbm %s3, %s457
          %s460 = sshll.u32 %s449, 4
          %s461 = int_to_ptr.vmem [resolvable:$true] %s460
          %463 = dma.vmem_to_hbm [thread:$0]  %s461, 384, %s458, %s446
        $region40: #{tpu_custom_call.1} parent=31 // pred_fallthru
          _
      $region32: #{tpu_custom_call.1} parent=5 // pred_fallthru
        _
      %p464 = scmp.le.s32.totalorder 2, %s15
      // Predicated region
      $region41: #{tpu_custom_call.1} parent=5 // pred_check
        %p465 = pneg %p464
      $region42: #{tpu_custom_call.1} parent=5 // pred_check_branch
        %467 = sbr.rel (%p465) target = $region44
      $region43: #{tpu_custom_call.1} parent=5 // pred_region
        %s468 = ssub.s32 %s15, 2
        // Predicated region
        $region45: #{tpu_custom_call.1} parent=43 // pred_check
          %p469 = pneg %p112
        $region46: #{tpu_custom_call.1} parent=43 // pred_check_branch
          %471 = sbr.rel (%p469) target = $region48
        $region47: #{tpu_custom_call.1} parent=43 // pred_region
          %s472 = sand.u32 %s97, 1
          %s473 = scalar_lea.sflag [#allocation4], %s472
          %s474 = sand.u32 %s97, 1
          %s475 = smul.addr %s474, 24
          %s476 = scalar_lea.vmem [#allocation5], %s475
          %477 = dma.done %s473, 384
        $region48: #{tpu_custom_call.1} parent=43 // pred_fallthru
          _
      $region44: #{tpu_custom_call.1} parent=5 // pred_fallthru
        _
    $region6: #{tpu_custom_call.1} parent=1 // loop_footer
      %s19 = sadd.s32 1, %s15
    $region7: #{tpu_custom_call.1} parent=1 // loop_footer_branch
      %14 = sbr.rel target = $region3
    $region8: #{tpu_custom_call.1} parent=1 // loop_exit
      _
    %478 = vsyncpa [#allocation3], 1
    %s479 = scalar_lea.sflag [#allocation3], 1
    %480 = vsyncpa %s479, 1
    %481 = vsyncpa [#allocation4], 1
    %s482 = scalar_lea.sflag [#allocation4], 1
    %483 = vsyncpa %s482, 1

</llo_original>
